<compile_context>
chip_gen: v5e
topology: v5e:2x2
jax: 0.10.0
libtpu: 0.0.40
codegen_flags: <defaults>
</compile_context>

<pallas_src>
import jax
import jax.numpy as jnp
from jax.experimental import pallas as pl
from jax.experimental.pallas import tpu as pltpu


_NEG_BIG = -1e30  # sentinel bias for padded choice lanes: exp underflows to 0
                  # (valid for f32 bias; do not move the bias to f16)


def _cdiv(a, b):
    return -(-a // b)


def _round_up(v, m):
    return _cdiv(v, m) * m


# ------------------------------ kernels ------------------------------------


def _cat_gen_kernel_nomask(x_ref, w_ref, b_ref, probs_ref):
    C = probs_ref.shape[-1]
    # MXU matmul in the weight dtype (bf16) with f32 accumulation.
    logits = jnp.dot(x_ref[...].astype(w_ref.dtype), w_ref[...],
                     preferred_element_type=jnp.float32) + b_ref[...]
    m = jnp.max(logits, axis=-1, keepdims=True)
    p = jnp.exp(logits - m)[:, :C]                 # padded lanes -> exp(-1e30)=0
    denom = jnp.sum(p, axis=-1, keepdims=True)
    inv = 1.0 / jnp.maximum(denom, 1e-30)          # exact reciprocal
    probs_ref[...] = (p * inv).astype(probs_ref.dtype)


def _cat_gen_kernel_masked(x_ref, w_ref, b_ref, mask_ref, probs_ref):
    C = probs_ref.shape[-1]
    logits = jnp.dot(x_ref[...].astype(w_ref.dtype), w_ref[...],
                     preferred_element_type=jnp.float32) + b_ref[...]
    # Fused softmax * mask -> single renormalization (softmax denom cancels).
    m = jnp.max(logits, axis=-1, keepdims=True)
    p = jnp.exp(logits - m)[:, :C]
    p = p * mask_ref[...].astype(jnp.float32)      # int8/bool or float masks
    denom = jnp.sum(p, axis=-1, keepdims=True)
    inv = 1.0 / jnp.maximum(denom, 1e-30)          # guards all-masked / padded rows
    probs_ref[...] = (p * inv).astype(probs_ref.dtype)


# ------------------------------ wrappers ------------------------------------


def prepare_params(weight, bias, *, compute_dtype=jnp.bfloat16):
    """One-time parameter prep (hoisted out of the per-call path).

    weight: [choice_num, input_size]  (torch nn.Linear layout)
    bias:   [choice_num]
    Returns (w_prepped [input_size, C_pad] compute_dtype,
             b_prepped [1, C_pad] float32 with -1e30 in padded lanes,
             choice_num)
    """
    C, K = weight.shape
    C_pad = _round_up(C, 128)
    w_t = weight.T.astype(compute_dtype)                    # [K, C]
    if C_pad != C:
        w_t = jnp.pad(w_t, ((0, 0), (0, C_pad - C)))
    b_p = jnp.full((1, C_pad), _NEG_BIG, dtype=jnp.float32)
    b_p = b_p.at[0, :C].set(bias.astype(jnp.float32))
    return w_t, b_p, C


def _choose_batch_tiling(B, block_b):
    """Adaptive batch tile: small row padding, >=2 blocks for v7x megacore."""
    nb = _cdiv(B, block_b)
    if B >= 16 and nb < 2:
        nb = 2                                   # let both v7x TensorCores work
    TB = _round_up(_cdiv(B, nb), 8)              # multiple of 8 sublanes
    B_pad = TB * nb
    return TB, nb, B_pad


def categorical_generator_probs(x, w_prepped, b_prepped, choice_num,
                                mask=None, *, block_b=512):
    """Normalized categorical probabilities (== Categorical(probs=...).probs).

    x:         [B, input_size]   float32 or bfloat16
    w_prepped: [input_size, C_pad]  (from prepare_params)
    b_prepped: [1, C_pad]           (from prepare_params)
    mask:      [B, choice_num]   int8 / bool / float, or None
    Returns probs: [B, choice_num] float32
    """
    B, K = x.shape
    K2, C_pad = w_prepped.shape
    assert K == K2, "x feature dim does not match prepared weight"
    C = choice_num

    TB, nb, B_pad = _choose_batch_tiling(B, block_b)
    x_p = x if B_pad == B else jnp.pad(x, ((0, B_pad - B), (0, 0)))

    x_spec = pl.BlockSpec((TB, K), lambda i: (i, 0))
    b_spec = pl.BlockSpec((1, C_pad), lambda i: (0, 0))        # grid-invariant
    out_spec = pl.BlockSpec((TB, C), lambda i: (i, 0))          # unpadded lanes

    # Grid-invariant weight: single-buffer it when the block is big enough to
    # matter for v7x's 64 MiB VMEM; otherwise keep the default pipelining.
    w_block_bytes = K * C_pad * w_prepped.dtype.itemsize
    if w_block_bytes >= (4 << 20):
        w_spec = pl.BlockSpec((K, C_pad), lambda i: (0, 0),
                              pipeline_mode=pl.Buffered(1))
        w_bufs = 1
    else:
        w_spec = pl.BlockSpec((K, C_pad), lambda i: (0, 0))
        w_bufs = 2

    operands = [x_p, w_prepped, b_prepped]
    in_specs = [x_spec, w_spec, b_spec]
    kernel = _cat_gen_kernel_nomask
    mask_block_bytes = 0
    if mask is not None:
        if mask.dtype == jnp.bool_:
            mask = mask.astype(jnp.int8)        # 1 byte/elem of HBM traffic
        if B_pad != B:
            mask = jnp.pad(mask, ((0, B_pad - B), (0, 0)))
        in_specs.append(pl.BlockSpec((TB, C), lambda i: (i, 0)))
        operands.append(mask)
        kernel = _cat_gen_kernel_masked
        mask_block_bytes = TB * C * mask.dtype.itemsize

    # Explicit VMEM budget (double-buffered tiles + headroom), capped for v7x.
    vmem_needed = (2 * TB * K * x_p.dtype.itemsize
                   + w_bufs * w_block_bytes
                   + 2 * C_pad * 4
                   + 2 * TB * C * 4
                   + 2 * mask_block_bytes
                   + (1 << 20))
    vmem_limit = int(min(max(2 * vmem_needed, 32 << 20), 64 << 20))

    out = pl.pallas_call(
        kernel,
        out_shape=jax.ShapeDtypeStruct((B_pad, C), jnp.float32),
        grid=(nb,),
        in_specs=in_specs,
        out_specs=out_spec,
        compiler_params=pltpu.CompilerParams(
            dimension_semantics=("parallel",),
            vmem_limit_bytes=vmem_limit),
    )(*operands)

    return out if B_pad == B else out[:B]


# ------------------------------ demo / checks --------------------------------


def _orthogonal_init(key, out_features, in_features, gain=0.01, dtype=jnp.float32):
    # Deterministic orthogonal init (mirrors nn.init.orthogonal_ semantics).
    a = jax.random.normal(key, (max(out_features, in_features),
                                min(out_features, in_features)), dtype=jnp.float32)
    q, r = jnp.linalg.qr(a)
    q = q * jnp.sign(jnp.diagonal(r))
    if out_features < in_features:
        q = q.T
    return (gain * q[:out_features, :in_features]).astype(dtype)


if __name__ == "__main__":
    key = jax.random.PRNGKey(0)
    k_x, k_w, k_m, k_x2, k_m2 = jax.random.split(key, 5)

    batch = 8
    input_size = 32
    choice_num = 16

    # Parameters (orthogonal with gain=0.01, zero bias, like the torch init);
    # prepared ONCE (bf16 cast + lane padding hoisted out of the forward path).
    W = _orthogonal_init(k_w, choice_num, input_size, gain=0.01)    # [out, in]
    b = jnp.zeros((choice_num,), dtype=jnp.float32)
    w_p, b_p, C = prepare_params(W, b)

    def ref_probs(x, mask=None):
        logits = x @ W.T + b
        p = jax.nn.softmax(logits, axis=-1)
        if mask is not None:
            p = p * mask.astype(jnp.float32)
            p = p / jnp.sum(p, axis=-1, keepdims=True)
        return p

    # ---- masked path (int8 action mask) ----
    x = jax.random.normal(k_x, (batch, input_size), dtype=jnp.float32)
    mask = (jax.random.uniform(k_m, (batch, choice_num)) > 0.3).astype(jnp.int8)
    mask = mask.at[:, 0].set(1)   # Categorical requires a positive row sum

    probs = jax.block_until_ready(categorical_generator_probs(x, w_p, b_p, C, mask))
    assert probs.shape == (batch, choice_num)
    assert jnp.allclose(probs, ref_probs(x, mask), atol=1e-3, rtol=1e-3), "masked mismatch"
    assert jnp.allclose(jnp.sum(probs, axis=-1), 1.0, atol=1e-5), "not normalized"

    # ---- unmasked path ----
    probs_nm = jax.block_until_ready(categorical_generator_probs(x, w_p, b_p, C, None))
    assert jnp.allclose(probs_nm, ref_probs(x), atol=1e-3, rtol=1e-3), "nomask mismatch"
    assert jnp.allclose(jnp.sum(probs_nm, axis=-1), 1.0, atol=1e-5), "not normalized"

    # ---- row-padding path (B not a multiple of the sublane/tile size) ----
    batch2 = 10
    x2 = jax.random.normal(k_x2, (batch2, input_size), dtype=jnp.float32)
    mask2 = (jax.random.uniform(k_m2, (batch2, choice_num)) > 0.3).astype(jnp.int8)
    mask2 = mask2.at[:, 0].set(1)
    probs2 = jax.block_until_ready(categorical_generator_probs(x2, w_p, b_p, C, mask2))
    assert probs2.shape == (batch2, choice_num)
    assert jnp.allclose(probs2, ref_probs(x2, mask2), atol=1e-3, rtol=1e-3), "padded-batch mismatch"
    assert jnp.allclose(jnp.sum(probs2, axis=-1), 1.0, atol=1e-5), "not normalized"

    # TODO(synk): torch.distributions.Categorical object construction
    # (sampling / log_prob machinery) has no Pallas equivalent; the kernel
    # returns the normalized `probs` tensor the distribution would hold.
    print("KERNEL_OK")
</pallas_src>

<mosaic_0001>
module attributes {stable_mosaic.version = 11 : i64} {
  func.func @_cat_gen_kernel_masked(%arg0: i32, %arg1: memref<8x32xf32, #tpu.memory_space<vmem>>, %arg2: memref<32x128xbf16, #tpu.memory_space<vmem>>, %arg3: memref<1x128xf32, #tpu.memory_space<vmem>>, %arg4: memref<8x16xi8, #tpu.memory_space<vmem>>, %arg5: memref<8x16xf32, #tpu.memory_space<vmem>>) attributes {dimension_semantics = [#tpu.dimension_semantics<parallel>], iteration_bounds = array<i64: 1>, scalar_prefetch = 0 : i64, scratch_operands = 0 : i64, tpu.core_type = #tpu.core_type<tc>, window_params = [{transform_indices = @transform_0, window_bounds = array<i64: 8, 32>}, {pipeline_mode = #tpu.pipeline_mode<synchronous>, transform_indices = @transform_1, window_bounds = array<i64: 32, 128>}, {pipeline_mode = #tpu.pipeline_mode<synchronous>, transform_indices = @transform_2, window_bounds = array<i64: 1, 128>}, {transform_indices = @transform_3, window_bounds = array<i64: 8, 16>}, {transform_indices = @transform_4, window_bounds = array<i64: 8, 16>}]} {
    %c0 = arith.constant 0 : index
    %c0_0 = arith.constant 0 : index
    %0 = vector.load %arg1[%c0, %c0_0] : memref<8x32xf32, #tpu.memory_space<vmem>>, vector<8x32xf32>
    %1 = arith.truncf %0 : vector<8x32xf32> to vector<8x32xbf16>
    %c0_1 = arith.constant 0 : index
    %c0_2 = arith.constant 0 : index
    %2 = vector.load %arg2[%c0_1, %c0_2] : memref<32x128xbf16, #tpu.memory_space<vmem>>, vector<32x128xbf16>
    %cst = arith.constant dense<0.000000e+00> : vector<8x128xf32>
    %3 = tpu.matmul %1, %2, %cst {dimension_numbers = #tpu.dot_dimension_numbers<[1], [0], [0], [1], [0, 0, 1, 1], [], []>} : vector<8x32xbf16>, vector<32x128xbf16>, vector<8x128xf32> -> vector<8x128xf32>
    %c0_3 = arith.constant 0 : index
    %c0_4 = arith.constant 0 : index
    %4 = vector.load %arg3[%c0_3, %c0_4] : memref<1x128xf32, #tpu.memory_space<vmem>>, vector<1x128xf32>
    %5 = vector.broadcast %4 : vector<1x128xf32> to vector<8x128xf32>
    %6 = arith.addf %3, %5 : vector<8x128xf32>
    %cst_5 = arith.constant dense<0xFF800000> : vector<8xf32>
    %7 = vector.multi_reduction <maximumf>, %6, %cst_5 [1] : vector<8x128xf32> to vector<8xf32>
    %8 = vector.shape_cast %7 : vector<8xf32> to vector<8x1xf32>
    %9 = vector.broadcast %8 : vector<8x1xf32> to vector<8x128xf32>
    %10 = arith.subf %6, %9 : vector<8x128xf32>
    %11 = math.exp %10 : vector<8x128xf32>
    %12 = vector.extract_strided_slice %11 {offsets = [0, 0], sizes = [8, 16], strides = [1, 1]} : vector<8x128xf32> to vector<8x16xf32>
    %c0_6 = arith.constant 0 : index
    %c0_7 = arith.constant 0 : index
    %13 = vector.load %arg4[%c0_6, %c0_7] : memref<8x16xi8, #tpu.memory_space<vmem>>, vector<8x16xi8>
    %14 = arith.sitofp %13 : vector<8x16xi8> to vector<8x16xf32>
    %15 = arith.mulf %12, %14 : vector<8x16xf32>
    %cst_8 = arith.constant dense<0.000000e+00> : vector<8xf32>
    %16 = vector.multi_reduction <add>, %15, %cst_8 [1] : vector<8x16xf32> to vector<8xf32>
    %17 = vector.shape_cast %16 : vector<8xf32> to vector<8x1xf32>
    %cst_9 = arith.constant 1.000000e-30 : f32
    %18 = vector.broadcast %cst_9 : f32 to vector<8x1xf32>
    %19 = arith.maximumf %17, %18 : vector<8x1xf32>
    %cst_10 = arith.constant 1.000000e+00 : f32
    %20 = vector.broadcast %cst_10 : f32 to vector<8x1xf32>
    %21 = arith.divf %20, %19 : vector<8x1xf32>
    %22 = vector.broadcast %21 : vector<8x1xf32> to vector<8x16xf32>
    %23 = arith.mulf %15, %22 : vector<8x16xf32>
    %c0_11 = arith.constant 0 : index
    %c0_12 = arith.constant 0 : index
    %24 = vector.load %arg5[%c0_11, %c0_12] : memref<8x16xf32, #tpu.memory_space<vmem>>, vector<8x16xf32>
    tpu.vector_store %arg5[%c0_11, %c0_12], %23 {strides = array<i32>} : memref<8x16xf32, #tpu.memory_space<vmem>>, vector<8x16xf32>,
    return
  }
  func.func @transform_0(%arg0: i32) -> (i32, i32) {
    %c0_i32 = arith.constant 0 : i32
    %c0_i32_0 = arith.constant 0 : i32
    return %arg0, %c0_i32 : i32, i32
  }
  func.func @transform_1(%arg0: i32) -> (i32, i32) {
    %c0_i32 = arith.constant 0 : i32
    %c0_i32_0 = arith.constant 0 : i32
    %c0_i32_1 = arith.constant 0 : i32
    return %c0_i32, %c0_i32_0 : i32, i32
  }
  func.func @transform_2(%arg0: i32) -> (i32, i32) {
    %c0_i32 = arith.constant 0 : i32
    %c0_i32_0 = arith.constant 0 : i32
    %c0_i32_1 = arith.constant 0 : i32
    return %c0_i32, %c0_i32_0 : i32, i32
  }
  func.func @transform_3(%arg0: i32) -> (i32, i32) {
    %c0_i32 = arith.constant 0 : i32
    %c0_i32_0 = arith.constant 0 : i32
    return %arg0, %c0_i32 : i32, i32
  }
  func.func @transform_4(%arg0: i32) -> (i32, i32) {
    %c0_i32 = arith.constant 0 : i32
    %c0_i32_0 = arith.constant 0 : i32
    return %arg0, %c0_i32 : i32, i32
  }
}

</mosaic_0001>

<llo_original>
// kernel: tpu_custom_call.1
$region0: #{tpu_custom_call.1}
  #allocation0 [shape = 'u32[]', space=smem, size = 0x4, offset = 0x4, fixed_abs, tag = 'smem constant byte address 0x4 - core index']
  #allocation1 [shape = 'u32[72,128]{1,0:T(1,128)}', space=vmem, size = 0x9000, scoped, tag = 'internal scratch']
  %s0 = inlined_call_operand.hbm [shape: f32[8,32], index: 0, kind: input, shape index: {}]
  %s1 = inlined_call_operand.hbm [shape: bf16[32,128], index: 1, kind: input, shape index: {}]
  %s2 = inlined_call_operand.hbm [shape: f32[1,128], index: 2, kind: input, shape index: {}]
  %s3 = inlined_call_operand.vmem [shape: s8[8,16], index: 3, kind: input, shape index: {}]
  %s4 = inlined_call_operand.hbm [shape: f32[8,16], index: 4, kind: output, shape index: {}]
  %s5 = sld [smem:[#allocation0]]
  $region38: #{tpu_custom_call.1} parent=0
    _
  %s7 = ssub.s32 1, %s5
  %s8 = scalar_select 0, %s7, %s5
  $region1: #{tpu_custom_call.1} parent=0
    #allocation2 [shape = 'u8[4096]{0}', space=vmem, size = 0x1000, scoped, tag = 'input window, operand 0, single buffered']
    #allocation3 [shape = 's32[1]{0}', space=sflag, size = 0x4, scoped, tag = 'scoped memory for tpu_custom_call.1']
    #allocation4 [shape = 's32[1]{0}', space=sflag, size = 0x4, scoped, tag = 'scoped memory for tpu_custom_call.1']
    #allocation5 [shape = 'u8[8192]{0}', space=vmem, size = 0x2000, scoped, tag = 'input window, operand 1, single buffered']
    #allocation6 [shape = 's32[1]{0}', space=sflag, size = 0x4, scoped, tag = 'scoped memory for tpu_custom_call.1']
    #allocation7 [shape = 'u8[512]{0}', space=vmem, size = 0x400, scoped, tag = 'input window, operand 2, single buffered']
    #allocation8 [shape = 'u8[4096]{0}', space=vmem, size = 0x1000, scoped, tag = 'output window, operand 0, single buffered']
    %9 = vsyncpa [#allocation3], 0
    %10 = vsyncpa [#allocation6], 0
    %11 = vsyncpa [#allocation4], 0
    // Predicated region
    $region2: #{tpu_custom_call.1} parent=1 // pred_check
      _
    $region3: #{tpu_custom_call.1} parent=1 // pred_check_branch
      %13 = sbr.rel (0) target = $region5
    $region4: #{tpu_custom_call.1} parent=1 // pred_region
      %15 = vsyncadd [#allocation3], 0
      %s17 = sshll.u32 %s0, 4
      %s18 = int_to_ptr.hbm [resolvable:$true] %s17
      %s19 = sshll.u32 [#allocation2], 4
      %s20 = int_to_ptr.vmem [resolvable:$true] %s19
      %22 = dma.hbm_to_vmem [thread:$0]  %s18, 128, %s20, [#allocation3]
    $region5: #{tpu_custom_call.1} parent=1 // pred_fallthru
      _
    // Predicated region
    $region6: #{tpu_custom_call.1} parent=1 // pred_check
      _
    $region7: #{tpu_custom_call.1} parent=1 // pred_check_branch
      %24 = sbr.rel (0) target = $region9
    $region8: #{tpu_custom_call.1} parent=1 // pred_region
      %26 = vsyncadd [#allocation6], 0
      %s27 = sshll.u32 %s1, 4
      %s28 = int_to_ptr.hbm [resolvable:$true] %s27
      %s29 = sshll.u32 [#allocation5], 4
      %s30 = int_to_ptr.vmem [resolvable:$true] %s29
      %35 = dma.hbm_to_vmem [thread:$0]  %s28, 256, %s30, [#allocation6], 64, 64, 4
    $region9: #{tpu_custom_call.1} parent=1 // pred_fallthru
      _
    // Predicated region
    $region10: #{tpu_custom_call.1} parent=1 // pred_check
      _
    $region11: #{tpu_custom_call.1} parent=1 // pred_check_branch
      %37 = sbr.rel (0) target = $region13
    $region12: #{tpu_custom_call.1} parent=1 // pred_region
      %39 = vsyncadd [#allocation6], 0
      %s41 = sshll.u32 %s2, 4
      %s42 = int_to_ptr.hbm [resolvable:$true] %s41
      %s43 = sshll.u32 [#allocation7], 4
      %s44 = int_to_ptr.vmem [resolvable:$true] %s43
      %46 = dma.hbm_to_vmem [thread:$0]  %s42, 16, %s44, [#allocation6]
    $region13: #{tpu_custom_call.1} parent=1 // pred_fallthru
      _
    // Predicated region
    $region14: #{tpu_custom_call.1} parent=1 // pred_check
      _
    $region15: #{tpu_custom_call.1} parent=1 // pred_check_branch
      %48 = sbr.rel (0) target = $region17
    $region16: #{tpu_custom_call.1} parent=1 // pred_region
      _
    $region17: #{tpu_custom_call.1} parent=1 // pred_fallthru
      _
    // Predicated region
    $region18: #{tpu_custom_call.1} parent=1 // pred_check
      _
    $region19: #{tpu_custom_call.1} parent=1 // pred_check_branch
      %50 = sbr.rel (0) target = $region21
    $region20: #{tpu_custom_call.1} parent=1 // pred_region
      %52 = dma.done [#allocation3], 128
    $region21: #{tpu_custom_call.1} parent=1 // pred_fallthru
      _
    // Predicated region
    $region22: #{tpu_custom_call.1} parent=1 // pred_check
      _
    $region23: #{tpu_custom_call.1} parent=1 // pred_check_branch
      %54 = sbr.rel (0) target = $region25
    $region24: #{tpu_custom_call.1} parent=1 // pred_region
      %56 = dma.done [#allocation6], 256
    $region25: #{tpu_custom_call.1} parent=1 // pred_fallthru
      _
    // Predicated region
    $region26: #{tpu_custom_call.1} parent=1 // pred_check
      _
    $region27: #{tpu_custom_call.1} parent=1 // pred_check_branch
      %58 = sbr.rel (0) target = $region29
    $region28: #{tpu_custom_call.1} parent=1 // pred_region
      %60 = dma.done [#allocation6], 16
    $region29: #{tpu_custom_call.1} parent=1 // pred_fallthru
      _
    %v62 = vld [vmem:[#allocation2] sm:$0xff]
    %v63 = vpack.c.bf16 %v62, %v62
    %v64 = vld [vmem:[#allocation5] sm:$0xf]
    %v65 = vld [vmem:[#allocation5 + $0x4] sm:$0xf]
    %v66 = vld [vmem:[#allocation5 + $0x8] sm:$0xf]
    %v67 = vld [vmem:[#allocation5 + $0xc] sm:$0xf]
    %v68 = vld [vmem:[#allocation7] sm:$0x1]
    %v70 = vperm.slane %v68, 0
    %v76 = vunpack.c.l.b16 %v64
    %v77 = vunpack.c.l.b16 %v65
    %v78 = vunpack.c.l.b16 %v66
    %v79 = vunpack.c.l.b16 %v67
    %v80 = vpack.c.b16 %v77, %v76
    %v81 = vpack.c.b16 %v79, %v78
    %vm84 = vcmask 261120
    %v86 = vsel %vm84, %v63, 0
    %88 = vmatpush.bf16.msra.mxu0 0
    %89 = vmatpush.bf16.msra.mxu0 0
    %90 = vmatpush.bf16.msra.mxu0 0
    %91 = vmatpush.bf16.msra.mxu0 0
    %92 = vmatpush.bf16.msra.mxu0 0
    %93 = vmatpush.bf16.msra.mxu0 0
    %94 = vmatpush.bf16.msra.mxu0 %v81
    %95 = vmatpush.bf16.msra.mxu0 %v80
    %96 = vmatmul.bf16.gmra.mxu0 %v86
    %v97 = vpop.f32.mrf.mxu0
    %v98 = vadd.f32 %v70, %v97
    %v99 = vpop.f32.mrf.mxu0
    %100 = vdwg.mxu0
    %101 = vmax.xlane.f32.xlu0 %v98
    %v102 = vpop.xlane.xlu0 %101
    %v103 = vsub.f32 %v98, %v102
    %v104 = vmul.f32 %v103, 1.442695
    %v105 = vpow.pop %v104
    %v106 = vld [vmem:[%s3] sm:$0x3]
    %v107 = vunpack.c.0.s8 %v106
    %v108 = vcvt.s32.f32 %v107
    %v109 = vmul.f32 %v105, %v108
    %vm110 = vcmask 130048
    %v111 = vsel %vm110, %v109, 0.0
    %112 = vadd.xlane.f32.xlu0 %v111
    %v113 = vpop.xlane.xlu0 %112
    %v114 = vmax.f32 %v113, 1e-30
    %v115 = vrcp.pop %v114
    %v116 = vmul.f32 %v114, %v115
    %v117 = vsub.f32 1.0, %v116
    %v118 = vmul.f32 %v115, %v117
    %v119 = vadd.f32 %v115, %v118
    %vm120 = vweird.f32 %v114
    %vm121 = vweird.f32 %v115
    %vm122 = vmor %vm120, %vm121
    %v123 = vsel %vm122, %v115, %v119
    %v124 = vand.u32 2147483647, %v114
    %vm125 = vcmp.eq.f32.partialorder %v124, 8.507059e+37
    %v126 = vand.u32 %v114, 2147483648
    %v127 = vor.u32 1.1754944e-38, %v126
    %v128 = vsel %vm125, %v127, %v123
    %v129 = vmul.f32 1.0, %v128
    %v130 = vmul.f32 %v109, %v129
    %131 = vst.msk [vmem:[#allocation8] sm:$0xff] %vm110, %v130
    // Predicated region
    $region30: #{tpu_custom_call.1} parent=1 // pred_check
      _
    $region31: #{tpu_custom_call.1} parent=1 // pred_check_branch
      %133 = sbr.rel (0) target = $region33
    $region32: #{tpu_custom_call.1} parent=1 // pred_region
      %135 = vsyncadd [#allocation4], 0
      %s137 = sshll.u32 [#allocation8], 4
      %s138 = int_to_ptr.vmem [resolvable:$true] %s137
      %s139 = sshll.u32 %s4, 4
      %s140 = int_to_ptr.hbm [resolvable:$true] %s139
      %142 = dma.vmem_to_hbm [thread:$0]  %s138, 128, %s140, [#allocation4]
    $region33: #{tpu_custom_call.1} parent=1 // pred_fallthru
      _
    // Predicated region
    $region34: #{tpu_custom_call.1} parent=1 // pred_check
      _
    $region35: #{tpu_custom_call.1} parent=1 // pred_check_branch
      %144 = sbr.rel (0) target = $region37
    $region36: #{tpu_custom_call.1} parent=1 // pred_region
      %146 = dma.done [#allocation4], 128
    $region37: #{tpu_custom_call.1} parent=1 // pred_fallthru
      _
    %147 = vsyncpa [#allocation3], 1
    %148 = vsyncpa [#allocation6], 1
    %149 = vsyncpa [#allocation4], 1

</llo_original>
